<compile_context>
chip_gen: v6e
topology: v6e:2x2x1
jax: 0.10.0
libtpu: 0.0.40
codegen_flags: <defaults>
</compile_context>

<pallas_src>
import functools
import math

import jax
import jax.numpy as jnp
from jax.experimental import pallas as pl
from jax.experimental.pallas import tpu as pltpu


def mha_kernel(x_ref, wqkv_ref, bqkv_ref, wproj_ref, bproj_ref, bias_ref,
               o_ref, y_acc, *, n_head, q_tile, num_q_tiles):
    """One grid step = (batch b, query-tile qi). qkv proj, attention, out proj."""
    T = x_ref.shape[1]
    C = x_ref.shape[2]
    hd = C // n_head
    scale = 1.0 / math.sqrt(hd)

    x_full = x_ref[0]                                   # (T, C) bf16 (full seq, for K/V)
    if num_q_tiles == 1:
        xq = x_full                                     # (Tq == T, C)
    else:
        qstart = pl.multiple_of(pl.program_id(1) * q_tile, q_tile)
        xq = x_ref[0, pl.ds(qstart, q_tile), :]         # (Tq, C)

    wqkv = wqkv_ref[...]                                # (C, 3C) bf16
    bqkv = bqkv_ref[...]                                # (1, 3C) f32

    # Query projection only for this tile; key/value projection over the full sequence.
    q = jnp.dot(xq, wqkv[:, 0:C],
                preferred_element_type=jnp.float32) + bqkv[:, 0:C]          # (Tq, C) f32
    q = q * scale                                       # scale hoisted: once, not per head
    kv = jnp.dot(x_full, wqkv[:, C:3 * C],
                 preferred_element_type=jnp.float32) + bqkv[:, C:3 * C]     # (T, 2C) f32

    q_bf = q.astype(jnp.bfloat16)
    k_bf = kv[:, 0:C].astype(jnp.bfloat16)
    v_bf = kv[:, C:2 * C].astype(jnp.bfloat16)

    bias = bias_ref[...]                                # (Tq, T) additive mask bias, f32

    nt_dims = (((1,), (1,)), ((), ()))                  # contract last dims: q @ k^T, no transpose
    for h in range(n_head):                             # static unroll over heads
        sl = slice(h * hd, (h + 1) * hd)
        att = jax.lax.dot_general(q_bf[:, sl], k_bf[:, sl], nt_dims,
                                  preferred_element_type=jnp.float32)       # (Tq, T) f32
        att = att + bias                                # masked_fill as additive bias
        att_max = jnp.max(att, axis=-1, keepdims=True)
        e = jnp.exp(att - att_max)
        p = e * pl.reciprocal(jnp.sum(e, axis=-1, keepdims=True), approx=True)
        # TODO(synk): attn_dropout not implemented (eval mode = identity).
        y_acc[:, sl] = jnp.dot(p.astype(jnp.bfloat16), v_bf[:, sl],
                               preferred_element_type=jnp.float32)          # (Tq, hd)

    # y_acc now holds the head-concatenated result == transpose(1,2).view(B,T,C).
    y = y_acc[...].astype(jnp.bfloat16)                 # (Tq, C)
    out = jnp.dot(y, wproj_ref[...],
                  preferred_element_type=jnp.float32) + bproj_ref[...]      # (Tq, C) f32
    # TODO(synk): resid_dropout not implemented (eval mode = identity).
    o_ref[0] = out.astype(o_ref.dtype)


def mha_forward(x, w_qkv, b_qkv, w_proj, b_proj, padding_mask, *, n_head,
                q_tile=128):
    B, T, C = x.shape
    assert C % n_head == 0
    q_tile = min(q_tile, T)
    assert T % q_tile == 0, "T must be divisible by the query tile"
    nq = T // q_tile

    # bf16 for MXU operands / HBM traffic; biases + mask bias stay f32.
    x_bf = x.astype(jnp.bfloat16)
    wqkv_bf = w_qkv.astype(jnp.bfloat16)
    wproj_bf = w_proj.astype(jnp.bfloat16)
    bqkv2 = b_qkv.reshape(1, 3 * C).astype(jnp.float32)
    bproj2 = b_proj.reshape(1, C).astype(jnp.float32)
    # Additive float mask bias (== masked_fill(mask == 1, -inf) up to tolerance;
    # a large finite negative avoids NaN on fully-masked rows).
    mask_bias = jnp.where(padding_mask != 0,
                          jnp.float32(-1e30), jnp.float32(0.0))

    kernel = functools.partial(mha_kernel, n_head=n_head, q_tile=q_tile,
                               num_q_tiles=nq)
    return pl.pallas_call(
        kernel,
        out_shape=jax.ShapeDtypeStruct((B, T, C), jnp.float32),
        grid=(B, nq),
        in_specs=[
            pl.BlockSpec((1, T, C), lambda b, qi: (b, 0, 0)),        # x (full seq per batch)
            pl.BlockSpec((C, 3 * C), lambda b, qi: (0, 0)),          # W_qkv (bf16, resident)
            pl.BlockSpec((1, 3 * C), lambda b, qi: (0, 0)),          # b_qkv
            pl.BlockSpec((C, C), lambda b, qi: (0, 0)),              # W_proj (bf16, resident)
            pl.BlockSpec((1, C), lambda b, qi: (0, 0)),              # b_proj
            pl.BlockSpec((q_tile, T), lambda b, qi: (qi, 0)),        # additive mask bias tile
        ],
        out_specs=pl.BlockSpec((1, q_tile, C), lambda b, qi: (b, qi, 0)),
        scratch_shapes=[pltpu.VMEM((q_tile, C), jnp.float32)],       # per-head output slab
        compiler_params=pltpu.CompilerParams(
            dimension_semantics=("parallel", "parallel"),
            vmem_limit_bytes=64 * 1024 * 1024),
    )(x_bf, wqkv_bf, bqkv2, wproj_bf, bproj2, mask_bias)


def mha_reference(x, w_qkv, b_qkv, w_proj, b_proj, padding_mask, *, n_head):
    """Plain-JAX f32 reference mirroring the PyTorch forward (eval mode)."""
    B, T, C = x.shape
    hd = C // n_head
    qkv = x @ w_qkv + b_qkv                                   # (B, T, 3C)
    q, k, v = jnp.split(qkv, 3, axis=2)
    q = q.reshape(B, T, n_head, hd).transpose(0, 2, 1, 3)     # (B, H, T, hd)
    k = k.reshape(B, T, n_head, hd).transpose(0, 2, 1, 3)
    v = v.reshape(B, T, n_head, hd).transpose(0, 2, 1, 3)
    att = jnp.einsum("bhqd,bhkd->bhqk", q, k) / math.sqrt(hd)
    att = jnp.where(padding_mask[None, None] != 0, -jnp.inf, att)
    att = jax.nn.softmax(att, axis=-1)
    y = jnp.einsum("bhqk,bhkd->bhqd", att, v)
    y = y.transpose(0, 2, 1, 3).reshape(B, T, C)
    return y @ w_proj + b_proj


if __name__ == "__main__":
    # small shapes consistent with the module
    B, T, C, H = 2, 8, 32, 4

    key = jax.random.PRNGKey(0)
    k_x, k_wqkv, k_bqkv, k_wp, k_bp = jax.random.split(key, 5)

    x = jax.random.normal(k_x, (B, T, C), dtype=jnp.float32)
    # deterministic synthetic parameters (shapes implied by nn.Linear in __init__)
    w_qkv = 0.02 * jax.random.normal(k_wqkv, (C, 3 * C), dtype=jnp.float32)
    b_qkv = 0.02 * jax.random.normal(k_bqkv, (3 * C,), dtype=jnp.float32)
    w_proj = 0.02 * jax.random.normal(k_wp, (C, C), dtype=jnp.float32)
    b_proj = 0.02 * jax.random.normal(k_bp, (C,), dtype=jnp.float32)

    # padding mask: mask out (== 1) the last two key positions for every query
    padding_mask = jnp.zeros((T, T), dtype=jnp.int32).at[:, T - 2:].set(1)

    out = mha_forward(x, w_qkv, b_qkv, w_proj, b_proj, padding_mask, n_head=H)
    out = jax.block_until_ready(out)

    ref = mha_reference(x, w_qkv, b_qkv, w_proj, b_proj, padding_mask, n_head=H)
    assert out.shape == (B, T, C)
    # bf16 MXU operands + approx reciprocal => compare to f32 reference with
    # correspondingly relaxed tolerance.
    assert jnp.allclose(out, ref, atol=1e-2, rtol=1e-2), "mismatch vs reference"

    print("KERNEL_OK")
</pallas_src>

<mosaic_0001>
module attributes {stable_mosaic.version = 11 : i64} {
  func.func @mha_kernel(%arg0: i32, %arg1: i32, %arg2: memref<1x8x32xbf16, #tpu.memory_space<vmem>>, %arg3: memref<32x96xbf16, #tpu.memory_space<vmem>>, %arg4: memref<1x96xf32, #tpu.memory_space<vmem>>, %arg5: memref<32x32xbf16, #tpu.memory_space<vmem>>, %arg6: memref<1x32xf32, #tpu.memory_space<vmem>>, %arg7: memref<8x8xf32, #tpu.memory_space<vmem>>, %arg8: memref<1x8x32xf32, #tpu.memory_space<vmem>>, %arg9: memref<8x32xf32, #tpu.memory_space<vmem>>) attributes {dimension_semantics = [#tpu.dimension_semantics<parallel>, #tpu.dimension_semantics<parallel>], iteration_bounds = array<i64: 2, 1>, scalar_prefetch = 0 : i64, scratch_operands = 1 : i64, tpu.core_type = #tpu.core_type<tc>, window_params = [{transform_indices = @transform_0, window_bounds = array<i64: 1, 8, 32>}, {pipeline_mode = #tpu.pipeline_mode<synchronous>, transform_indices = @transform_1, window_bounds = array<i64: 32, 96>}, {pipeline_mode = #tpu.pipeline_mode<synchronous>, transform_indices = @transform_2, window_bounds = array<i64: 1, 96>}, {pipeline_mode = #tpu.pipeline_mode<synchronous>, transform_indices = @transform_3, window_bounds = array<i64: 32, 32>}, {pipeline_mode = #tpu.pipeline_mode<synchronous>, transform_indices = @transform_4, window_bounds = array<i64: 1, 32>}, {transform_indices = @transform_5, window_bounds = array<i64: 8, 8>}, {transform_indices = @transform_6, window_bounds = array<i64: 1, 8, 32>}]} {
    %c0 = arith.constant 0 : index
    %c0_0 = arith.constant 0 : index
    %c0_1 = arith.constant 0 : index
    %0 = vector.load %arg2[%c0, %c0_0, %c0_1] : memref<1x8x32xbf16, #tpu.memory_space<vmem>>, vector<1x8x32xbf16>
    %1 = vector.shape_cast %0 : vector<1x8x32xbf16> to vector<8x32xbf16>
    %c0_2 = arith.constant 0 : index
    %c0_3 = arith.constant 0 : index
    %2 = vector.load %arg3[%c0_2, %c0_3] : memref<32x96xbf16, #tpu.memory_space<vmem>>, vector<32x96xbf16>
    %c0_4 = arith.constant 0 : index
    %c0_5 = arith.constant 0 : index
    %3 = vector.load %arg4[%c0_4, %c0_5] : memref<1x96xf32, #tpu.memory_space<vmem>>, vector<1x96xf32>
    %4 = vector.extract_strided_slice %2 {offsets = [0, 0], sizes = [32, 32], strides = [1, 1]} : vector<32x96xbf16> to vector<32x32xbf16>
    %cst = arith.constant dense<0.000000e+00> : vector<8x32xf32>
    %5 = tpu.matmul %1, %4, %cst {dimension_numbers = #tpu.dot_dimension_numbers<[1], [0], [0], [1], [0, 0, 1, 1], [], []>} : vector<8x32xbf16>, vector<32x32xbf16>, vector<8x32xf32> -> vector<8x32xf32>
    %6 = vector.extract_strided_slice %3 {offsets = [0, 0], sizes = [1, 32], strides = [1, 1]} : vector<1x96xf32> to vector<1x32xf32>
    %7 = vector.broadcast %6 : vector<1x32xf32> to vector<8x32xf32>
    %8 = arith.addf %5, %7 : vector<8x32xf32>
    %cst_6 = arith.constant 0.353553385 : f32
    %9 = vector.broadcast %cst_6 : f32 to vector<8x32xf32>
    %10 = arith.mulf %8, %9 : vector<8x32xf32>
    %11 = vector.extract_strided_slice %2 {offsets = [0, 32], sizes = [32, 64], strides = [1, 1]} : vector<32x96xbf16> to vector<32x64xbf16>
    %cst_7 = arith.constant dense<0.000000e+00> : vector<8x64xf32>
    %12 = tpu.matmul %1, %11, %cst_7 {dimension_numbers = #tpu.dot_dimension_numbers<[1], [0], [0], [1], [0, 0, 1, 1], [], []>} : vector<8x32xbf16>, vector<32x64xbf16>, vector<8x64xf32> -> vector<8x64xf32>
    %13 = vector.extract_strided_slice %3 {offsets = [0, 32], sizes = [1, 64], strides = [1, 1]} : vector<1x96xf32> to vector<1x64xf32>
    %14 = vector.broadcast %13 : vector<1x64xf32> to vector<8x64xf32>
    %15 = arith.addf %12, %14 : vector<8x64xf32>
    %16 = arith.truncf %10 : vector<8x32xf32> to vector<8x32xbf16>
    %17 = vector.extract_strided_slice %15 {offsets = [0, 0], sizes = [8, 32], strides = [1, 1]} : vector<8x64xf32> to vector<8x32xf32>
    %18 = arith.truncf %17 : vector<8x32xf32> to vector<8x32xbf16>
    %19 = vector.extract_strided_slice %15 {offsets = [0, 32], sizes = [8, 32], strides = [1, 1]} : vector<8x64xf32> to vector<8x32xf32>
    %20 = arith.truncf %19 : vector<8x32xf32> to vector<8x32xbf16>
    %c0_8 = arith.constant 0 : index
    %c0_9 = arith.constant 0 : index
    %21 = vector.load %arg7[%c0_8, %c0_9] : memref<8x8xf32, #tpu.memory_space<vmem>>, vector<8x8xf32>
    %22 = vector.extract_strided_slice %16 {offsets = [0, 0], sizes = [8, 8], strides = [1, 1]} : vector<8x32xbf16> to vector<8x8xbf16>
    %23 = vector.extract_strided_slice %18 {offsets = [0, 0], sizes = [8, 8], strides = [1, 1]} : vector<8x32xbf16> to vector<8x8xbf16>
    %cst_10 = arith.constant dense<0.000000e+00> : vector<8x8xf32>
    %24 = tpu.matmul %22, %23, %cst_10 {dimension_numbers = #tpu.dot_dimension_numbers<[1], [1], [0], [0], [0, 0, 1, 0], [], []>} : vector<8x8xbf16>, vector<8x8xbf16>, vector<8x8xf32> -> vector<8x8xf32>
    %25 = arith.addf %24, %21 : vector<8x8xf32>
    %cst_11 = arith.constant dense<0xFF800000> : vector<8xf32>
    %26 = vector.multi_reduction <maximumf>, %25, %cst_11 [1] : vector<8x8xf32> to vector<8xf32>
    %27 = vector.shape_cast %26 : vector<8xf32> to vector<8x1xf32>
    %28 = vector.broadcast %27 : vector<8x1xf32> to vector<8x8xf32>
    %29 = arith.subf %25, %28 : vector<8x8xf32>
    %30 = math.exp %29 : vector<8x8xf32>
    %cst_12 = arith.constant dense<0.000000e+00> : vector<8xf32>
    %31 = vector.multi_reduction <add>, %30, %cst_12 [1] : vector<8x8xf32> to vector<8xf32>
    %32 = vector.shape_cast %31 : vector<8xf32> to vector<8x1xf32>
    %33 = tpu.reciprocal %32 {approx = true} : vector<8x1xf32> -> vector<8x1xf32>
    %34 = vector.broadcast %33 : vector<8x1xf32> to vector<8x8xf32>
    %35 = arith.mulf %30, %34 : vector<8x8xf32>
    %36 = arith.truncf %35 : vector<8x8xf32> to vector<8x8xbf16>
    %37 = vector.extract_strided_slice %20 {offsets = [0, 0], sizes = [8, 8], strides = [1, 1]} : vector<8x32xbf16> to vector<8x8xbf16>
    %cst_13 = arith.constant dense<0.000000e+00> : vector<8x8xf32>
    %38 = tpu.matmul %36, %37, %cst_13 {dimension_numbers = #tpu.dot_dimension_numbers<[1], [0], [0], [1], [0, 0, 1, 1], [], []>} : vector<8x8xbf16>, vector<8x8xbf16>, vector<8x8xf32> -> vector<8x8xf32>
    %c0_14 = arith.constant 0 : index
    %c0_15 = arith.constant 0 : index
    %39 = vector.load %arg9[%c0_14, %c0_15] : memref<8x32xf32, #tpu.memory_space<vmem>>, vector<8x8xf32>
    tpu.vector_store %arg9[%c0_14, %c0_15], %38 {strides = array<i32>} : memref<8x32xf32, #tpu.memory_space<vmem>>, vector<8x8xf32>,
    %40 = vector.extract_strided_slice %16 {offsets = [0, 8], sizes = [8, 8], strides = [1, 1]} : vector<8x32xbf16> to vector<8x8xbf16>
    %41 = vector.extract_strided_slice %18 {offsets = [0, 8], sizes = [8, 8], strides = [1, 1]} : vector<8x32xbf16> to vector<8x8xbf16>
    %cst_16 = arith.constant dense<0.000000e+00> : vector<8x8xf32>
    %42 = tpu.matmul %40, %41, %cst_16 {dimension_numbers = #tpu.dot_dimension_numbers<[1], [1], [0], [0], [0, 0, 1, 0], [], []>} : vector<8x8xbf16>, vector<8x8xbf16>, vector<8x8xf32> -> vector<8x8xf32>
    %43 = arith.addf %42, %21 : vector<8x8xf32>
    %cst_17 = arith.constant dense<0xFF800000> : vector<8xf32>
    %44 = vector.multi_reduction <maximumf>, %43, %cst_17 [1] : vector<8x8xf32> to vector<8xf32>
    %45 = vector.shape_cast %44 : vector<8xf32> to vector<8x1xf32>
    %46 = vector.broadcast %45 : vector<8x1xf32> to vector<8x8xf32>
    %47 = arith.subf %43, %46 : vector<8x8xf32>
    %48 = math.exp %47 : vector<8x8xf32>
    %cst_18 = arith.constant dense<0.000000e+00> : vector<8xf32>
    %49 = vector.multi_reduction <add>, %48, %cst_18 [1] : vector<8x8xf32> to vector<8xf32>
    %50 = vector.shape_cast %49 : vector<8xf32> to vector<8x1xf32>
    %51 = tpu.reciprocal %50 {approx = true} : vector<8x1xf32> -> vector<8x1xf32>
    %52 = vector.broadcast %51 : vector<8x1xf32> to vector<8x8xf32>
    %53 = arith.mulf %48, %52 : vector<8x8xf32>
    %54 = arith.truncf %53 : vector<8x8xf32> to vector<8x8xbf16>
    %55 = vector.extract_strided_slice %20 {offsets = [0, 8], sizes = [8, 8], strides = [1, 1]} : vector<8x32xbf16> to vector<8x8xbf16>
    %cst_19 = arith.constant dense<0.000000e+00> : vector<8x8xf32>
    %56 = tpu.matmul %54, %55, %cst_19 {dimension_numbers = #tpu.dot_dimension_numbers<[1], [0], [0], [1], [0, 0, 1, 1], [], []>} : vector<8x8xbf16>, vector<8x8xbf16>, vector<8x8xf32> -> vector<8x8xf32>
    %c0_20 = arith.constant 0 : index
    %c8 = arith.constant 8 : index
    %57 = vector.load %arg9[%c0_20, %c8] : memref<8x32xf32, #tpu.memory_space<vmem>>, vector<8x8xf32>
    tpu.vector_store %arg9[%c0_20, %c8], %56 {strides = array<i32>} : memref<8x32xf32, #tpu.memory_space<vmem>>, vector<8x8xf32>,
    %58 = vector.extract_strided_slice %16 {offsets = [0, 16], sizes = [8, 8], strides = [1, 1]} : vector<8x32xbf16> to vector<8x8xbf16>
    %59 = vector.extract_strided_slice %18 {offsets = [0, 16], sizes = [8, 8], strides = [1, 1]} : vector<8x32xbf16> to vector<8x8xbf16>
    %cst_21 = arith.constant dense<0.000000e+00> : vector<8x8xf32>
    %60 = tpu.matmul %58, %59, %cst_21 {dimension_numbers = #tpu.dot_dimension_numbers<[1], [1], [0], [0], [0, 0, 1, 0], [], []>} : vector<8x8xbf16>, vector<8x8xbf16>, vector<8x8xf32> -> vector<8x8xf32>
    %61 = arith.addf %60, %21 : vector<8x8xf32>
    %cst_22 = arith.constant dense<0xFF800000> : vector<8xf32>
    %62 = vector.multi_reduction <maximumf>, %61, %cst_22 [1] : vector<8x8xf32> to vector<8xf32>
    %63 = vector.shape_cast %62 : vector<8xf32> to vector<8x1xf32>
    %64 = vector.broadcast %63 : vector<8x1xf32> to vector<8x8xf32>
    %65 = arith.subf %61, %64 : vector<8x8xf32>
    %66 = math.exp %65 : vector<8x8xf32>
    %cst_23 = arith.constant dense<0.000000e+00> : vector<8xf32>
    %67 = vector.multi_reduction <add>, %66, %cst_23 [1] : vector<8x8xf32> to vector<8xf32>
    %68 = vector.shape_cast %67 : vector<8xf32> to vector<8x1xf32>
    %69 = tpu.reciprocal %68 {approx = true} : vector<8x1xf32> -> vector<8x1xf32>
    %70 = vector.broadcast %69 : vector<8x1xf32> to vector<8x8xf32>
    %71 = arith.mulf %66, %70 : vector<8x8xf32>
    %72 = arith.truncf %71 : vector<8x8xf32> to vector<8x8xbf16>
    %73 = vector.extract_strided_slice %20 {offsets = [0, 16], sizes = [8, 8], strides = [1, 1]} : vector<8x32xbf16> to vector<8x8xbf16>
    %cst_24 = arith.constant dense<0.000000e+00> : vector<8x8xf32>
    %74 = tpu.matmul %72, %73, %cst_24 {dimension_numbers = #tpu.dot_dimension_numbers<[1], [0], [0], [1], [0, 0, 1, 1], [], []>} : vector<8x8xbf16>, vector<8x8xbf16>, vector<8x8xf32> -> vector<8x8xf32>
    %c0_25 = arith.constant 0 : index
    %c16 = arith.constant 16 : index
    %75 = vector.load %arg9[%c0_25, %c16] : memref<8x32xf32, #tpu.memory_space<vmem>>, vector<8x8xf32>
    tpu.vector_store %arg9[%c0_25, %c16], %74 {strides = array<i32>} : memref<8x32xf32, #tpu.memory_space<vmem>>, vector<8x8xf32>,
    %76 = vector.extract_strided_slice %16 {offsets = [0, 24], sizes = [8, 8], strides = [1, 1]} : vector<8x32xbf16> to vector<8x8xbf16>
    %77 = vector.extract_strided_slice %18 {offsets = [0, 24], sizes = [8, 8], strides = [1, 1]} : vector<8x32xbf16> to vector<8x8xbf16>
    %cst_26 = arith.constant dense<0.000000e+00> : vector<8x8xf32>
    %78 = tpu.matmul %76, %77, %cst_26 {dimension_numbers = #tpu.dot_dimension_numbers<[1], [1], [0], [0], [0, 0, 1, 0], [], []>} : vector<8x8xbf16>, vector<8x8xbf16>, vector<8x8xf32> -> vector<8x8xf32>
    %79 = arith.addf %78, %21 : vector<8x8xf32>
    %cst_27 = arith.constant dense<0xFF800000> : vector<8xf32>
    %80 = vector.multi_reduction <maximumf>, %79, %cst_27 [1] : vector<8x8xf32> to vector<8xf32>
    %81 = vector.shape_cast %80 : vector<8xf32> to vector<8x1xf32>
    %82 = vector.broadcast %81 : vector<8x1xf32> to vector<8x8xf32>
    %83 = arith.subf %79, %82 : vector<8x8xf32>
    %84 = math.exp %83 : vector<8x8xf32>
    %cst_28 = arith.constant dense<0.000000e+00> : vector<8xf32>
    %85 = vector.multi_reduction <add>, %84, %cst_28 [1] : vector<8x8xf32> to vector<8xf32>
    %86 = vector.shape_cast %85 : vector<8xf32> to vector<8x1xf32>
    %87 = tpu.reciprocal %86 {approx = true} : vector<8x1xf32> -> vector<8x1xf32>
    %88 = vector.broadcast %87 : vector<8x1xf32> to vector<8x8xf32>
    %89 = arith.mulf %84, %88 : vector<8x8xf32>
    %90 = arith.truncf %89 : vector<8x8xf32> to vector<8x8xbf16>
    %91 = vector.extract_strided_slice %20 {offsets = [0, 24], sizes = [8, 8], strides = [1, 1]} : vector<8x32xbf16> to vector<8x8xbf16>
    %cst_29 = arith.constant dense<0.000000e+00> : vector<8x8xf32>
    %92 = tpu.matmul %90, %91, %cst_29 {dimension_numbers = #tpu.dot_dimension_numbers<[1], [0], [0], [1], [0, 0, 1, 1], [], []>} : vector<8x8xbf16>, vector<8x8xbf16>, vector<8x8xf32> -> vector<8x8xf32>
    %c0_30 = arith.constant 0 : index
    %c24 = arith.constant 24 : index
    %93 = vector.load %arg9[%c0_30, %c24] : memref<8x32xf32, #tpu.memory_space<vmem>>, vector<8x8xf32>
    tpu.vector_store %arg9[%c0_30, %c24], %92 {strides = array<i32>} : memref<8x32xf32, #tpu.memory_space<vmem>>, vector<8x8xf32>,
    %c0_31 = arith.constant 0 : index
    %c0_32 = arith.constant 0 : index
    %94 = vector.load %arg9[%c0_31, %c0_32] : memref<8x32xf32, #tpu.memory_space<vmem>>, vector<8x32xf32>
    %95 = arith.truncf %94 : vector<8x32xf32> to vector<8x32xbf16>
    %c0_33 = arith.constant 0 : index
    %c0_34 = arith.constant 0 : index
    %96 = vector.load %arg5[%c0_33, %c0_34] : memref<32x32xbf16, #tpu.memory_space<vmem>>, vector<32x32xbf16>
    %cst_35 = arith.constant dense<0.000000e+00> : vector<8x32xf32>
    %97 = tpu.matmul %95, %96, %cst_35 {dimension_numbers = #tpu.dot_dimension_numbers<[1], [0], [0], [1], [0, 0, 1, 1], [], []>} : vector<8x32xbf16>, vector<32x32xbf16>, vector<8x32xf32> -> vector<8x32xf32>
    %c0_36 = arith.constant 0 : index
    %c0_37 = arith.constant 0 : index
    %98 = vector.load %arg6[%c0_36, %c0_37] : memref<1x32xf32, #tpu.memory_space<vmem>>, vector<1x32xf32>
    %99 = vector.broadcast %98 : vector<1x32xf32> to vector<8x32xf32>
    %100 = arith.addf %97, %99 : vector<8x32xf32>
    %c0_38 = arith.constant 0 : index
    %c0_39 = arith.constant 0 : index
    %c0_40 = arith.constant 0 : index
    %101 = vector.load %arg8[%c0_38, %c0_39, %c0_40] : memref<1x8x32xf32, #tpu.memory_space<vmem>>, vector<1x8x32xf32>
    %102 = vector.shape_cast %101 : vector<1x8x32xf32> to vector<8x32xf32>
    %103 = vector.shape_cast %100 : vector<8x32xf32> to vector<1x8x32xf32>
    tpu.vector_store %arg8[%c0_38, %c0_39, %c0_40], %103 {strides = array<i32>} : memref<1x8x32xf32, #tpu.memory_space<vmem>>, vector<1x8x32xf32>,
    return
  }
  func.func @transform_0(%arg0: i32, %arg1: i32) -> (i32, i32, i32) {
    %c0_i32 = arith.constant 0 : i32
    %c0_i32_0 = arith.constant 0 : i32
    %c0_i32_1 = arith.constant 0 : i32
    return %arg0, %c0_i32, %c0_i32_0 : i32, i32, i32
  }
  func.func @transform_1(%arg0: i32, %arg1: i32) -> (i32, i32) {
    %c0_i32 = arith.constant 0 : i32
    %c0_i32_0 = arith.constant 0 : i32
    %c0_i32_1 = arith.constant 0 : i32
    return %c0_i32, %c0_i32_0 : i32, i32
  }
  func.func @transform_2(%arg0: i32, %arg1: i32) -> (i32, i32) {
    %c0_i32 = arith.constant 0 : i32
    %c0_i32_0 = arith.constant 0 : i32
    %c0_i32_1 = arith.constant 0 : i32
    return %c0_i32, %c0_i32_0 : i32, i32
  }
  func.func @transform_3(%arg0: i32, %arg1: i32) -> (i32, i32) {
    %c0_i32 = arith.constant 0 : i32
    %c0_i32_0 = arith.constant 0 : i32
    %c0_i32_1 = arith.constant 0 : i32
    return %c0_i32, %c0_i32_0 : i32, i32
  }
  func.func @transform_4(%arg0: i32, %arg1: i32) -> (i32, i32) {
    %c0_i32 = arith.constant 0 : i32
    %c0_i32_0 = arith.constant 0 : i32
    %c0_i32_1 = arith.constant 0 : i32
    return %c0_i32, %c0_i32_0 : i32, i32
  }
  func.func @transform_5(%arg0: i32, %arg1: i32) -> (i32, i32) {
    %c0_i32 = arith.constant 0 : i32
    %c0_i32_0 = arith.constant 0 : i32
    return %arg1, %c0_i32 : i32, i32
  }
  func.func @transform_6(%arg0: i32, %arg1: i32) -> (i32, i32, i32) {
    %c0_i32 = arith.constant 0 : i32
    %c0_i32_0 = arith.constant 0 : i32
    return %arg0, %arg1, %c0_i32 : i32, i32, i32
  }
}

</mosaic_0001>

<llo_original>
// kernel: tpu_custom_call.1
$region0: #{tpu_custom_call.1}
  #allocation0 [shape = 'u32[]', space=smem, size = 0x4, offset = 0x4, fixed_abs, tag = 'smem constant byte address 0x4 - core index']
  #allocation1 [shape = 'u32[144,128]{1,0:T(1,128)}', space=vmem, size = 0x12000, scoped, tag = 'internal scratch']
  #allocation2 [shape = 'f32[8,32]{1,0:T(8,128)}', space=vmem, size = 0x1000, scoped, tag = 'scratch operand']
  %s0 = inlined_call_operand.hbm [shape: bf16[2,8,32], index: 0, kind: input, shape index: {}]
  %s1 = inlined_call_operand.hbm [shape: bf16[32,96], index: 1, kind: input, shape index: {}]
  %s2 = inlined_call_operand.vmem [shape: f32[1,96], index: 2, kind: input, shape index: {}]
  %s3 = inlined_call_operand.hbm [shape: bf16[32,32], index: 3, kind: input, shape index: {}]
  %s4 = inlined_call_operand.hbm [shape: f32[1,32], index: 4, kind: input, shape index: {}]
  %s5 = inlined_call_operand.vmem [shape: f32[8,8], index: 5, kind: input, shape index: {}]
  %s6 = inlined_call_operand.hbm [shape: f32[2,8,32], index: 6, kind: output, shape index: {}]
  %s7 = sld [smem:[#allocation0]]
  $region73: #{tpu_custom_call.1} parent=0
    _
  %s9 = ssub.s32 1, %s7
  %s10 = scalar_select 0, %s9, %s7
  $region1: #{tpu_custom_call.1} parent=0
    #allocation3 [shape = 'u8[4096]{0}', space=vmem, size = 0x1000, scoped, tag = 'input window, operand 0']
    #allocation4 [shape = 's32[2]{0}', space=sflag, size = 0x8, scoped, tag = 'scoped memory for tpu_custom_call.1']
    #allocation5 [shape = 's32[2]{0}', space=sflag, size = 0x8, scoped, tag = 'scoped memory for tpu_custom_call.1']
    #allocation6 [shape = 'u8[8192]{0}', space=vmem, size = 0x2000, scoped, tag = 'input window, operand 1, single buffered']
    #allocation7 [shape = 's32[1]{0}', space=sflag, size = 0x4, scoped, tag = 'scoped memory for tpu_custom_call.1']
    #allocation8 [shape = 'u8[8192]{0}', space=vmem, size = 0x2000, scoped, tag = 'input window, operand 3, single buffered']
    #allocation9 [shape = 'u8[512]{0}', space=vmem, size = 0x400, scoped, tag = 'input window, operand 4, single buffered']
    #allocation10 [shape = 's32[1]{0}', space=sflag, size = 0x4, scoped, tag = 'scoped memory for tpu_custom_call.1']
    #allocation11 [shape = 'u8[8192]{0}', space=vmem, size = 0x2000, scoped, tag = 'output window, operand 0']
    %11 = vsyncpa [#allocation4], 0
    %s12 = scalar_lea.sflag [#allocation4], 1
    %13 = vsyncpa %s12, 0
    %14 = vsyncpa [#allocation7], 0
    %15 = vsyncpa [#allocation10], 0
    %16 = vsyncpa [#allocation5], 0
    %s17 = scalar_lea.sflag [#allocation5], 1
    %18 = vsyncpa %s17, 0
    loop: start=0, step=1, limit=4
    $region2: #{tpu_custom_call.1} parent=1 // loop_pre_header
      _
    $region3: #{tpu_custom_call.1} parent=1 // loop_header
      %s20 = sphi 0, %s24
      %p21 = scmp.ge.s32.totalorder %s20, 4
      %s27 = sphi 0, %s39
      %s28 = sphi 0, %s35
      %s29 = sphi 0, %s27
      %s30 = sphi 0, %s28
      %s31 = sphi 0, %s29
      %s32 = sphi 0, %s30
      %s42 = sphi 0, %s44
      %s45 = sphi 0, %s42
      %s46 = sphi 0, %s45
      %s62 = sphi 0, %s46
      %s66 = sphi 0, %s66
      %s68 = sphi 0, %s66
      %s69 = sphi 0, %s68
      %s83 = sphi 0, %s69
      %s87 = sphi 0, %s87
      %s89 = sphi 0, %s87
      %s90 = sphi 0, %s89
      %s104 = sphi 0, %s90
      %s108 = sphi 0, %s108
      %s110 = sphi 0, %s108
      %s111 = sphi 0, %s110
      %s125 = sphi 0, %s111
      %s129 = sphi 0, %s129
      %s131 = sphi 0, %s129
      %s132 = sphi 0, %s131
      %s146 = sphi 0, %s132
      %s152 = sphi 0, %s154
      %s155 = sphi 0, %s152
      %s156 = sphi 0, %s155
      %s172 = sphi 0, %s156
      %s180 = sphi 0, %s182
      %s183 = sphi 0, %s180
      %s184 = sphi 0, %s183
      %s200 = sphi 0, %s184
    $region4: #{tpu_custom_call.1} parent=1 // loop_header_branch
      %23 = sbr.rel (%p21) target = $region8
    $region5: #{tpu_custom_call.1} parent=1 // loop_body
      %s25 = ssub.s32 %s20, 1
      %s26 = ssub.s32 %s20, 2
      %s33 = sadd.s32 1, %s28
      %p34 = scmp.ge.s32.totalorder %s33, 1
      %s35 = scalar_select %p34, 0, %s33
      %s36 = sadd.s32 1, %s27
      %s37 = scalar_select %p34, %s36, %s27
      %p38 = scmp.ge.s32.totalorder %s37, 2
      %s39 = scalar_select %p38, 0, %s37
      %s40 = ssub.s32 %s27, %s39
      %p41 = scmp.eq.s32.totalorder %s40, 0
      %s43 = sadd.s32 %s42, 1
      %s44 = scalar_select %p41, %s42, %s43
      %p47 = pneg %p41
      %p48 = scmp.eq.s32.totalorder %s20, 1
      %p49 = por %p47, %p48
      %p50 = scmp.ne.s32.totalorder %s42, %s45
      %p51 = scmp.eq.s32.totalorder %s20, 0
      %p52 = por %p50, %p51
      %p53 = scmp.ne.s32.totalorder %s42, %s45
      %p54 = scmp.eq.s32.totalorder %s25, 1
      %p55 = por %p53, %p54
      %p56 = scmp.ne.s32.totalorder %s45, %s46
      %p57 = scmp.eq.s32.totalorder %s25, 0
      %p58 = por %p56, %p57
      %p59 = scmp.ne.s32.totalorder %s45, %s46
      %p60 = scmp.eq.s32.totalorder %s26, 1
      %p61 = por %p59, %p60
      %p63 = scmp.ne.s32.totalorder %s46, %s62
      %p64 = scmp.eq.s32.totalorder %s26, 0
      %p65 = por %p63, %p64
      %s67 = sadd.s32 %s66, 1
      %p70 = scmp.eq.s32.totalorder %s20, 1
      %p71 = scmp.ne.s32.totalorder %s66, %s68
      %p72 = scmp.eq.s32.totalorder %s20, 0
      %p73 = por %p71, %p72
      %p74 = scmp.ne.s32.totalorder %s66, %s68
      %p75 = scmp.eq.s32.totalorder %s25, 1
      %p76 = por %p74, %p75
      %p77 = scmp.ne.s32.totalorder %s68, %s69
      %p78 = scmp.eq.s32.totalorder %s25, 0
      %p79 = por %p77, %p78
      %p80 = scmp.ne.s32.totalorder %s68, %s69
      %p81 = scmp.eq.s32.totalorder %s26, 1
      %p82 = por %p80, %p81
      %p84 = scmp.ne.s32.totalorder %s69, %s83
      %p85 = scmp.eq.s32.totalorder %s26, 0
      %p86 = por %p84, %p85
      %s88 = sadd.s32 %s87, 1
      %p91 = scmp.eq.s32.totalorder %s20, 1
      %p92 = scmp.ne.s32.totalorder %s87, %s89
      %p93 = scmp.eq.s32.totalorder %s20, 0
      %p94 = por %p92, %p93
      %p95 = scmp.ne.s32.totalorder %s87, %s89
      %p96 = scmp.eq.s32.totalorder %s25, 1
      %p97 = por %p95, %p96
      %p98 = scmp.ne.s32.totalorder %s89, %s90
      %p99 = scmp.eq.s32.totalorder %s25, 0
      %p100 = por %p98, %p99
      %p101 = scmp.ne.s32.totalorder %s89, %s90
      %p102 = scmp.eq.s32.totalorder %s26, 1
      %p103 = por %p101, %p102
      %p105 = scmp.ne.s32.totalorder %s90, %s104
      %p106 = scmp.eq.s32.totalorder %s26, 0
      %p107 = por %p105, %p106
      %s109 = sadd.s32 %s108, 1
      %p112 = scmp.eq.s32.totalorder %s20, 1
      %p113 = scmp.ne.s32.totalorder %s108, %s110
      %p114 = scmp.eq.s32.totalorder %s20, 0
      %p115 = por %p113, %p114
      %p116 = scmp.ne.s32.totalorder %s108, %s110
      %p117 = scmp.eq.s32.totalorder %s25, 1
      %p118 = por %p116, %p117
      %p119 = scmp.ne.s32.totalorder %s110, %s111
      %p120 = scmp.eq.s32.totalorder %s25, 0
      %p121 = por %p119, %p120
      %p122 = scmp.ne.s32.totalorder %s110, %s111
      %p123 = scmp.eq.s32.totalorder %s26, 1
      %p124 = por %p122, %p123
      %p126 = scmp.ne.s32.totalorder %s111, %s125
      %p127 = scmp.eq.s32.totalorder %s26, 0
      %p128 = por %p126, %p127
      %s130 = sadd.s32 %s129, 1
      %p133 = scmp.eq.s32.totalorder %s20, 1
      %p134 = scmp.ne.s32.totalorder %s129, %s131
      %p135 = scmp.eq.s32.totalorder %s20, 0
      %p136 = por %p134, %p135
      %p137 = scmp.ne.s32.totalorder %s129, %s131
      %p138 = scmp.eq.s32.totalorder %s25, 1
      %p139 = por %p137, %p138
      %p140 = scmp.ne.s32.totalorder %s131, %s132
      %p141 = scmp.eq.s32.totalorder %s25, 0
      %p142 = por %p140, %p141
      %p143 = scmp.ne.s32.totalorder %s131, %s132
      %p144 = scmp.eq.s32.totalorder %s26, 1
      %p145 = por %p143, %p144
      %p147 = scmp.ne.s32.totalorder %s132, %s146
      %p148 = scmp.eq.s32.totalorder %s26, 0
      %p149 = por %p147, %p148
      %s150 = ssub.s32 %s28, %s35
      %p151 = scmp.eq.s32.totalorder %s150, 0
      %s153 = sadd.s32 %s152, 1
      %s154 = scalar_select %p151, %s152, %s153
      %p157 = pneg %p151
      %p158 = scmp.eq.s32.totalorder %s20, 1
      %p159 = por %p157, %p158
      %p160 = scmp.ne.s32.totalorder %s152, %s155
      %p161 = scmp.eq.s32.totalorder %s20, 0
      %p162 = por %p160, %p161
      %p163 = scmp.ne.s32.totalorder %s152, %s155
      %p164 = scmp.eq.s32.totalorder %s25, 1
      %p165 = por %p163, %p164
      %p166 = scmp.ne.s32.totalorder %s155, %s156
      %p167 = scmp.eq.s32.totalorder %s25, 0
      %p168 = por %p166, %p167
      %p169 = scmp.ne.s32.totalorder %s155, %s156
      %p170 = scmp.eq.s32.totalorder %s26, 1
      %p171 = por %p169, %p170
      %p173 = scmp.ne.s32.totalorder %s156, %s172
      %p174 = scmp.eq.s32.totalorder %s26, 0
      %p175 = por %p173, %p174
      %s176 = ssub.s32 %s27, %s39
      %s177 = ssub.s32 %s28, %s35
      %s178 = sor.u32 %s176, %s177
      %p179 = scmp.eq.s32.totalorder %s178, 0
      %s181 = sadd.s32 %s180, 1
      %s182 = scalar_select %p179, %s180, %s181
      %p185 = pneg %p179
      %p186 = scmp.eq.s32.totalorder %s20, 1
      %p187 = por %p185, %p186
      %p188 = scmp.ne.s32.totalorder %s180, %s183
      %p189 = scmp.eq.s32.totalorder %s20, 0
      %p190 = por %p188, %p189
      %p191 = scmp.ne.s32.totalorder %s180, %s183
      %p192 = scmp.eq.s32.totalorder %s25, 1
      %p193 = por %p191, %p192
      %p194 = scmp.ne.s32.totalorder %s183, %s184
      %p195 = scmp.eq.s32.totalorder %s25, 0
      %p196 = por %p194, %p195
      %p197 = scmp.ne.s32.totalorder %s183, %s184
      %p198 = scmp.eq.s32.totalorder %s26, 1
      %p199 = por %p197, %p198
      %p201 = scmp.ne.s32.totalorder %s184, %s200
      %p202 = scmp.eq.s32.totalorder %s26, 0
      %p203 = por %p201, %p202
      %p204 = scmp.le.s32.totalorder 1, %s20
      %p205 = scmp.lt.s32.totalorder %s20, 3
      %p206 = pnand %p204, %p205
      %p207 = pneg %p206
      // Predicated region
      $region9: #{tpu_custom_call.1} parent=5 // pred_check
        _
      $region10: #{tpu_custom_call.1} parent=5 // pred_check_branch
        %209 = sbr.rel (%p206) target = $region12
      $region11: #{tpu_custom_call.1} parent=5 // pred_region
        %s210 = ssub.s32 %s20, 1
        // Predicated region
        $region13: #{tpu_custom_call.1} parent=11 // pred_check
          %p211 = pneg %p79
        $region14: #{tpu_custom_call.1} parent=11 // pred_check_branch
          %213 = sbr.rel (%p211) target = $region16
        $region15: #{tpu_custom_call.1} parent=11 // pred_region
          %s215 = ssub.s32 256, 256
          %216 = vsyncadd [#allocation7], %s215
          %s217 = sshll.u32 [#allocation6], 4
          %s218 = int_to_ptr.vmem [resolvable:$true] %s217
          %223 = dma.hbm_to_vmem [thread:$0]  %s1, 256, %s218, [#allocation7], 64, 64, 4
        $region16: #{tpu_custom_call.1} parent=11 // pred_fallthru
          _
        // Predicated region
        $region17: #{tpu_custom_call.1} parent=11 // pred_check
          %p224 = pneg %p100
        $region18: #{tpu_custom_call.1} parent=11 // pred_check_branch
          %226 = sbr.rel (%p224) target = $region20
        $region19: #{tpu_custom_call.1} parent=11 // pred_region
          _
        $region20: #{tpu_custom_call.1} parent=11 // pred_fallthru
          _
        // Predicated region
        $region21: #{tpu_custom_call.1} parent=11 // pred_check
          %p227 = pneg %p121
        $region22: #{tpu_custom_call.1} parent=11 // pred_check_branch
          %229 = sbr.rel (%p227) target = $region24
        $region23: #{tpu_custom_call.1} parent=11 // pred_region
          %s231 = ssub.s32 256, 256
          %232 = vsyncadd [#allocation7], %s231
          %s233 = sshll.u32 [#allocation8], 4
          %s234 = int_to_ptr.vmem [resolvable:$true] %s233
          %239 = dma.hbm_to_vmem [thread:$0]  %s3, 256, %s234, [#allocation7], 64, 64, 4
        $region24: #{tpu_custom_call.1} parent=11 // pred_fallthru
          _
        // Predicated region
        $region25: #{tpu_custom_call.1} parent=11 // pred_check
          %p240 = pneg %p142
        $region26: #{tpu_custom_call.1} parent=11 // pred_check_branch
          %242 = sbr.rel (%p240) target = $region28
        $region27: #{tpu_custom_call.1} parent=11 // pred_region
          %s244 = ssub.s32 16, 16
          %245 = vsyncadd [#allocation10], %s244
          %s247 = sshll.u32 [#allocation9], 4
          %s248 = int_to_ptr.vmem [resolvable:$true] %s247
          %250 = dma.hbm_to_vmem [thread:$0]  %s4, 16, %s248, [#allocation10]
        $region28: #{tpu_custom_call.1} parent=11 // pred_fallthru
          _
        // Predicated region
        $region29: #{tpu_custom_call.1} parent=11 // pred_check
          %p251 = pneg %p168
        $region30: #{tpu_custom_call.1} parent=11 // pred_check_branch
          %253 = sbr.rel (%p251) target = $region32
        $region31: #{tpu_custom_call.1} parent=11 // pred_region
          %p254 = scmp.lt.s32.totalorder %s30, 0
          %s255 = scalar_select %p254, %s30, 0
          %s256 = smul.addr %s255, 8
          %s257 = scalar_lea.vmem %s5, %s256
        $region32: #{tpu_custom_call.1} parent=11 // pred_fallthru
          _
      $region12: #{tpu_custom_call.1} parent=5 // pred_fallthru
        _
      %p258 = scmp.lt.s32.totalorder %s20, 2
      // Predicated region
      $region33: #{tpu_custom_call.1} parent=5 // pred_check
        %p259 = pneg %p258
      $region34: #{tpu_custom_call.1} parent=5 // pred_check_branch
        %261 = sbr.rel (%p259) target = $region36
      $region35: #{tpu_custom_call.1} parent=5 // pred_region
        // Predicated region
        $region37: #{tpu_custom_call.1} parent=35 // pred_check
          %p262 = pneg %p52
        $region38: #{tpu_custom_call.1} parent=35 // pred_check_branch
          %264 = sbr.rel (%p262) target = $region40
        $region39: #{tpu_custom_call.1} parent=35 // pred_region
          %s265 = sand.u32 %s42, 1
          %s266 = scalar_lea.sflag [#allocation4], %s265
          %s267 = sand.u32 %s42, 1
          %s268 = smul.addr %s267, 4
          %s269 = scalar_lea.vmem [#allocation3], %s268
          %s271 = ssub.s32 64, 64
          %272 = vsyncadd %s266, %s271
          %s273 = smul.addr %s27, 64
          %s274 = scalar_lea.hbm %s0, %s273
          %s276 = sshll.u32 %s269, 4
          %s277 = int_to_ptr.vmem [resolvable:$true] %s276
          %279 = dma.hbm_to_vmem [thread:$0]  %s274, 64, %s277, %s266
        $region40: #{tpu_custom_call.1} parent=35 // pred_fallthru
          _
      $region36: #{tpu_custom_call.1} parent=5 // pred_fallthru
        _
      %p280 = scmp.le.s32.totalorder 1, %s20
      %p281 = scmp.lt.s32.totalorder %s20, 3
      %p282 = pnand %p280, %p281
      %p283 = pneg %p282
      // Predicated region
      $region41: #{tpu_custom_call.1} parent=5 // pred_check
        _
      $region42: #{tpu_custom_call.1} parent=5 // pred_check_branch
        %285 = sbr.rel (%p282) target = $region44
      $region43: #{tpu_custom_call.1} parent=5 // pred_region
        %s286 = ssub.s32 %s20, 1
        %s287 = sand.u32 %s45, 1
        %s288 = scalar_lea.sflag [#allocation4], %s287
        %s289 = sand.u32 %s45, 1
        %s290 = smul.addr %s289, 4
        %s291 = scalar_lea.vmem [#allocation3], %s290
        // Predicated region
        $region45: #{tpu_custom_call.1} parent=43 // pred_check
          %p292 = pneg %p58
        $region46: #{tpu_custom_call.1} parent=43 // pred_check_branch
          %294 = sbr.rel (%p292) target = $region48
        $region47: #{tpu_custom_call.1} parent=43 // pred_region
          %295 = dma.done %s288, 64
        $region48: #{tpu_custom_call.1} parent=43 // pred_fallthru
          _
        // Predicated region
        $region49: #{tpu_custom_call.1} parent=43 // pred_check
          %p296 = pneg %p79
        $region50: #{tpu_custom_call.1} parent=43 // pred_check_branch
          %298 = sbr.rel (%p296) target = $region52
        $region51: #{tpu_custom_call.1} parent=43 // pred_region
          %299 = dma.done [#allocation7], 256
        $region52: #{tpu_custom_call.1} parent=43 // pred_fallthru
          _
        // Predicated region
        $region53: #{tpu_custom_call.1} parent=43 // pred_check
          %p300 = pneg %p121
        $region54: #{tpu_custom_call.1} parent=43 // pred_check_branch
          %302 = sbr.rel (%p300) target = $region56
        $region55: #{tpu_custom_call.1} parent=43 // pred_region
          %303 = dma.done [#allocation7], 256
        $region56: #{tpu_custom_call.1} parent=43 // pred_fallthru
          _
        // Predicated region
        $region57: #{tpu_custom_call.1} parent=43 // pred_check
          %p304 = pneg %p142
        $region58: #{tpu_custom_call.1} parent=43 // pred_check_branch
          %306 = sbr.rel (%p304) target = $region60
        $region59: #{tpu_custom_call.1} parent=43 // pred_region
          %307 = dma.done [#allocation10], 16
        $region60: #{tpu_custom_call.1} parent=43 // pred_fallthru
          _
        %s308 = sand.u32 %s45, 1
        %s309 = scalar_lea.sflag [#allocation4], %s308
        %s310 = sand.u32 %s45, 1
        %s311 = smul.addr %s310, 4
        %s312 = scalar_lea.vmem [#allocation3], %s311
        %p313 = pneg %p58
        %p314 = pneg %p55
        %p315 = pneg %p79
        %p316 = pneg %p76
        %p317 = pneg %p100
        %p318 = pneg %p97
        %p319 = pneg %p121
        %p320 = pneg %p118
        %p321 = pneg %p142
        %p322 = pneg %p139
        %p323 = scmp.lt.s32.totalorder %s30, 0
        %s324 = scalar_select %p323, %s30, 0
        %s325 = smul.addr %s324, 8
        %s326 = scalar_lea.vmem %s5, %s325
        %p327 = pneg %p168
        %p328 = pneg %p165
        %p329 = pneg %p196
        %p330 = pneg %p193
        %s331 = sand.u32 %s183, 1
        %s332 = scalar_lea.sflag [#allocation5], %s331
        %s333 = sand.u32 %s183, 1
        %s334 = smul.addr %s333, 8
        %s335 = scalar_lea.vmem [#allocation11], %s334
        %p336 = scmp.lt.s32.totalorder %s30, 0
        %s337 = scalar_select %p336, %s30, 0
        %s338 = smul.addr %s337, 8
        %s339 = scalar_lea.vmem %s5, %s338
        %v341 = vld [vmem:[%s291] sm:$0xf]
        %v342 = vld [vmem:[#allocation6] sm:$0xf]
        %v343 = vld [vmem:[#allocation6 + $0x4] sm:$0xf]
        %v344 = vld [vmem:[#allocation6 + $0x8] sm:$0xf]
        %v345 = vld [vmem:[#allocation6 + $0xc] sm:$0xf]
        %v346 = vld [vmem:[%s2] sm:$0x1]
        %v348 = vlaneseq
        %v349 = vshrl.u32 %v348, 7
        %v350 = vsub.s32 0, %v349
        %v351 = vrot.slane %v346, %v350
        %v357 = vunpack.c.l.b16 %v342
        %v358 = vunpack.c.l.b16 %v343
        %v359 = vunpack.c.l.b16 %v344
        %v360 = vunpack.c.l.b16 %v345
        %v361 = vpack.c.b16 %v358, %v357
        %v362 = vpack.c.b16 %v360, %v359
        %vm365 = vcmask 261120
        %v367 = vsel %vm365, %v341, 0
        %369 = vmatprep.subr.bf16.mxu0 0
        %370 = vmatpush1.bf16.msra.mxu0 0
        %371 = vmatprep.subr.bf16.mxu0 0
        %372 = vmatpush1.bf16.msra.mxu0 0
        %373 = vmatprep.subr.bf16.mxu0 0
        %374 = vmatpush1.bf16.msra.mxu0 0
        %375 = vmatprep.subr.bf16.mxu0 0
        %376 = vmatpush1.bf16.msra.mxu0 0
        %377 = vmatprep.subr.bf16.mxu0 0
        %378 = vmatpush1.bf16.msra.mxu0 0
        %379 = vmatprep.subr.bf16.mxu0 0
        %380 = vmatpush1.bf16.msra.mxu0 0
        %381 = vmatprep.subr.bf16.mxu0 0
        %382 = vmatpush1.bf16.msra.mxu0 %v362
        %383 = vmatprep.subr.bf16.mxu0 0
        %384 = vmatpush1.bf16.msra.mxu0 %v361
        %385 = vmatprep.subr.bf16.mxu0 0
        %386 = vmatpush2.bf16.msra.mxu0 0
        %387 = vmatprep.subr.bf16.mxu0 0
        %388 = vmatpush2.bf16.msra.mxu0 0
        %389 = vmatprep.subr.bf16.mxu0 0
        %390 = vmatpush2.bf16.msra.mxu0 0
        %391 = vmatprep.subr.bf16.mxu0 0
        %392 = vmatpush2.bf16.msra.mxu0 0
        %393 = vmatprep.subr.bf16.mxu0 0
        %394 = vmatpush2.bf16.msra.mxu0 0
        %395 = vmatprep.subr.bf16.mxu0 0
        %396 = vmatpush2.bf16.msra.mxu0 0
        %397 = vmatprep.subr.bf16.mxu0 0
        %398 = vmatpush2.bf16.msra.mxu0 0
        %399 = vmatprep.subr.bf16.mxu0 0
        %400 = vmatpush2.bf16.msra.mxu0 0
        %401 = vmatprep.mubr.bf16.mxu0 0
        %402 = vmatmul.mubr.bf16.gmra.mxu0 %v367
        %v403 = vpop.f32.mrf.mxu0
        %v404 = vadd.f32 %v351, %v403
        %v405 = vpop.f32.mrf.mxu0
        %v406 = vpop.f32.mrf.mxu0
        %v407 = vpop.f32.mrf.mxu0
        %408 = vdwg.mxu0
        %v409 = vmul.f32 %v404, 0.35355338
        %410 = vrot.lane.b32.xlu0 %v361, 96
        %v411 = vpop.permute.xlu0 %410
        %412 = vrot.lane.b32.xlu0 %v362, 96
        %v413 = vpop.permute.xlu0 %412
        %416 = vrot.lane.b32.xlu0 %v351, 96
        %v417 = vpop.permute.xlu0 %416
        %419 = vmatprep.subr.bf16.mxu0 0
        %420 = vmatpush1.bf16.msra.mxu0 0
        %421 = vmatprep.subr.bf16.mxu0 0
        %422 = vmatpush1.bf16.msra.mxu0 0
        %423 = vmatprep.subr.bf16.mxu0 0
        %424 = vmatpush1.bf16.msra.mxu0 0
        %425 = vmatprep.subr.bf16.mxu0 0
        %426 = vmatpush1.bf16.msra.mxu0 0
        %427 = vmatprep.subr.bf16.mxu0 0
        %428 = vmatpush1.bf16.msra.mxu0 0
        %429 = vmatprep.subr.bf16.mxu0 0
        %430 = vmatpush1.bf16.msra.mxu0 0
        %431 = vmatprep.subr.bf16.mxu0 0
        %432 = vmatpush1.bf16.msra.mxu0 %v413
        %433 = vmatprep.subr.bf16.mxu0 0
        %434 = vmatpush1.bf16.msra.mxu0 %v411
        %435 = vmatprep.subr.bf16.mxu0 0
        %436 = vmatpush2.bf16.msra.mxu0 0
        %437 = vmatprep.subr.bf16.mxu0 0
        %438 = vmatpush2.bf16.msra.mxu0 0
        %439 = vmatprep.subr.bf16.mxu0 0
        %440 = vmatpush2.bf16.msra.mxu0 0
        %441 = vmatprep.subr.bf16.mxu0 0
        %442 = vmatpush2.bf16.msra.mxu0 0
        %443 = vmatprep.subr.bf16.mxu0 0
        %444 = vmatpush2.bf16.msra.mxu0 0
        %445 = vmatprep.subr.bf16.mxu0 0
        %446 = vmatpush2.bf16.msra.mxu0 0
        %447 = vmatprep.subr.bf16.mxu0 0
        %448 = vmatpush2.bf16.msra.mxu0 0
        %449 = vmatprep.subr.bf16.mxu0 0
        %450 = vmatpush2.bf16.msra.mxu0 0
        %451 = vmatprep.mubr.bf16.mxu0 0
        %452 = vmatmul.mubr.bf16.gmra.mxu0 %v367
        %v453 = vpop.f32.mrf.mxu0
        %v454 = vadd.f32 %v417, %v453
        %v455 = vpop.f32.mrf.mxu0
        %v456 = vpop.f32.mrf.mxu0
        %v457 = vpop.f32.mrf.mxu0
        %458 = vdwg.mxu0
        %v459 = vpack.c.bf16 %v409, %v409
        %v460 = vpack.c.bf16 %v454, %v454
        %v461 = vld [vmem:[%s339] sm:$0xff]
        %vm462 = vcmask 64512
        %v464 = vsel %vm462, %v459, 0
        %v467 = vsel %vm462, %v460, 0
        %469 = vmatprep.subr.bf16.mxu0 0
        %470 = vmatpush1.bf16.xpose.msra.mxu0 0
        %471 = vmatprep.subr.bf16.mxu0 0
        %472 = vmatpush1.bf16.xpose.msra.mxu0 0
        %473 = vmatprep.subr.bf16.mxu0 0
        %474 = vmatpush1.bf16.xpose.msra.mxu0 0
        %475 = vmatprep.subr.bf16.mxu0 0
        %476 = vmatpush1.bf16.xpose.msra.mxu0 0
        %477 = vmatprep.subr.bf16.mxu0 0
        %478 = vmatpush1.bf16.xpose.msra.mxu0 0
        %479 = vmatprep.subr.bf16.mxu0 0
        %480 = vmatpush1.bf16.xpose.msra.mxu0 0
        %481 = vmatprep.subr.bf16.mxu0 0
        %482 = vmatpush1.bf16.xpose.msra.mxu0 0
        %483 = vmatprep.subr.bf16.mxu0 0
        %484 = vmatpush1.bf16.xpose.msra.mxu0 %v467
        %485 = vmatprep.subr.bf16.mxu0 0
        %486 = vmatpush2.bf16.xpose.msra.mxu0 0
        %487 = vmatprep.subr.bf16.mxu0 0
        %488 = vmatpush2.bf16.xpose.msra.mxu0 0
        %489 = vmatprep.subr.bf16.mxu0 0
        %490 = vmatpush2.bf16.xpose.msra.mxu0 0
        %491 = vmatprep.subr.bf16.mxu0 0
        %492 = vmatpush2.bf16.xpose.msra.mxu0 0
        %493 = vmatprep.subr.bf16.mxu0 0
        %494 = vmatpush2.bf16.xpose.msra.mxu0 0
        %495 = vmatprep.subr.bf16.mxu0 0
        %496 = vmatpush2.bf16.xpose.msra.mxu0 0
        %497 = vmatprep.subr.bf16.mxu0 0
        %498 = vmatpush2.bf16.xpose.msra.mxu0 0
        %499 = vmatprep.subr.bf16.mxu0 0
        %500 = vmatpush2.bf16.xpose.msra.mxu0 0
        %501 = vmatprep.mubr.bf16.mxu0 0
        %502 = vmatmul.mubr.bf16.gmra.mxu0 %v464
        %v503 = vpop.f32.mrf.mxu0
        %v504 = vadd.f32 %v461, %v503
        %v505 = vpop.f32.mrf.mxu0
        %v506 = vpop.f32.mrf.mxu0
        %v507 = vpop.f32.mrf.mxu0
        %508 = vdwg.mxu0
        %v509 = vsel %vm462, %v504, -inf
        %510 = vmax.xlane.f32.xlu0 %v509
        %v511 = vpop.xlane.xlu0 %510
        %v512 = vsub.f32 %v504, %v511
        %v513 = vmul.f32 %v512, 1.442695
        %v514 = vpow.pop %v513
        %v515 = vsel %vm462, %v514, 0.0
        %516 = vadd.xlane.f32.xlu0 %v515
        %v517 = vpop.xlane.xlu0 %516
        %v518 = vrcp.pop %v517
        %v519 = vmul.f32 %v514, %v518
        %v520 = vpack.c.bf16 %v519, %v519
        %522 = vrot.lane.b32.xlu0 %v460, 96
        %v523 = vpop.permute.xlu0 %522
        %v525 = vsel %vm462, %v520, 0
        %vm527 = vcmask 1043456
        %v529 = vsel %vm527, %v523, 0
        %531 = vmatprep.subr.bf16.mxu0 0
        %532 = vmatpush1.bf16.msra.mxu0 0
        %533 = vmatprep.subr.bf16.mxu0 0
        %534 = vmatpush1.bf16.msra.mxu0 0
        %535 = vmatprep.subr.bf16.mxu0 0
        %536 = vmatpush1.bf16.msra.mxu0 0
        %537 = vmatprep.subr.bf16.mxu0 0
        %538 = vmatpush1.bf16.msra.mxu0 0
        %539 = vmatprep.subr.bf16.mxu0 0
        %540 = vmatpush1.bf16.msra.mxu0 0
        %541 = vmatprep.subr.bf16.mxu0 0
        %542 = vmatpush1.bf16.msra.mxu0 0
        %543 = vmatprep.subr.bf16.mxu0 0
        %544 = vmatpush1.bf16.msra.mxu0 0
        %545 = vmatprep.subr.bf16.mxu0 0
        %546 = vmatpush1.bf16.msra.mxu0 %v529
        %547 = vmatprep.subr.bf16.mxu0 0
        %548 = vmatpush2.bf16.msra.mxu0 0
        %549 = vmatprep.subr.bf16.mxu0 0
        %550 = vmatpush2.bf16.msra.mxu0 0
        %551 = vmatprep.subr.bf16.mxu0 0
        %552 = vmatpush2.bf16.msra.mxu0 0
        %553 = vmatprep.subr.bf16.mxu0 0
        %554 = vmatpush2.bf16.msra.mxu0 0
        %555 = vmatprep.subr.bf16.mxu0 0
        %556 = vmatpush2.bf16.msra.mxu0 0
        %557 = vmatprep.subr.bf16.mxu0 0
        %558 = vmatpush2.bf16.msra.mxu0 0
        %559 = vmatprep.subr.bf16.mxu0 0
        %560 = vmatpush2.bf16.msra.mxu0 0
        %561 = vmatprep.subr.bf16.mxu0 0
        %562 = vmatpush2.bf16.msra.mxu0 0
        %563 = vmatprep.mubr.bf16.mxu0 0
        %564 = vmatmul.mubr.bf16.gmra.mxu0 %v525
        %v565 = vpop.f32.mrf.mxu0
        %v566 = vadd.f32 0.0, %v565
        %v567 = vpop.f32.mrf.mxu0
        %v568 = vpop.f32.mrf.mxu0
        %v569 = vpop.f32.mrf.mxu0
        %570 = vdwg.mxu0
        %571 = vst.msk [vmem:[#allocation2] sm:$0xff] %vm462, %v566
        %573 = vrot.lane.b32.xlu0 %v459, 120
        %v574 = vpop.permute.xlu0 %573
        %575 = vrot.lane.b32.xlu0 %v460, 120
        %v576 = vpop.permute.xlu0 %575
        %v578 = vsel %vm462, %v574, 0
        %v581 = vsel %vm462, %v576, 0
        %583 = vmatprep.subr.bf16.mxu0 0
        %584 = vmatpush1.bf16.xpose.msra.mxu0 0
        %585 = vmatprep.subr.bf16.mxu0 0
        %586 = vmatpush1.bf16.xpose.msra.mxu0 0
        %587 = vmatprep.subr.bf16.mxu0 0
        %588 = vmatpush1.bf16.xpose.msra.mxu0 0
        %589 = vmatprep.subr.bf16.mxu0 0
        %590 = vmatpush1.bf16.xpose.msra.mxu0 0
        %591 = vmatprep.subr.bf16.mxu0 0
        %592 = vmatpush1.bf16.xpose.msra.mxu0 0
        %593 = vmatprep.subr.bf16.mxu0 0
        %594 = vmatpush1.bf16.xpose.msra.mxu0 0
        %595 = vmatprep.subr.bf16.mxu0 0
        %596 = vmatpush1.bf16.xpose.msra.mxu0 0
        %597 = vmatprep.subr.bf16.mxu0 0
        %598 = vmatpush1.bf16.xpose.msra.mxu0 %v581
        %599 = vmatprep.subr.bf16.mxu0 0
        %600 = vmatpush2.bf16.xpose.msra.mxu0 0
        %601 = vmatprep.subr.bf16.mxu0 0
        %602 = vmatpush2.bf16.xpose.msra.mxu0 0
        %603 = vmatprep.subr.bf16.mxu0 0
        %604 = vmatpush2.bf16.xpose.msra.mxu0 0
        %605 = vmatprep.subr.bf16.mxu0 0
        %606 = vmatpush2.bf16.xpose.msra.mxu0 0
        %607 = vmatprep.subr.bf16.mxu0 0
        %608 = vmatpush2.bf16.xpose.msra.mxu0 0
        %609 = vmatprep.subr.bf16.mxu0 0
        %610 = vmatpush2.bf16.xpose.msra.mxu0 0
        %611 = vmatprep.subr.bf16.mxu0 0
        %612 = vmatpush2.bf16.xpose.msra.mxu0 0
        %613 = vmatprep.subr.bf16.mxu0 0
        %614 = vmatpush2.bf16.xpose.msra.mxu0 0
        %615 = vmatprep.mubr.bf16.mxu0 0
        %616 = vmatmul.mubr.bf16.gmra.mxu0 %v578
        %v617 = vpop.f32.mrf.mxu0
        %v618 = vadd.f32 %v461, %v617
        %v619 = vpop.f32.mrf.mxu0
        %v620 = vpop.f32.mrf.mxu0
        %v621 = vpop.f32.mrf.mxu0
        %622 = vdwg.mxu0
        %v623 = vsel %vm462, %v618, -inf
        %624 = vmax.xlane.f32.xlu0 %v623
        %v625 = vpop.xlane.xlu0 %624
        %v626 = vsub.f32 %v618, %v625
        %v627 = vmul.f32 %v626, 1.442695
        %v628 = vpow.pop %v627
        %v629 = vsel %vm462, %v628, 0.0
        %630 = vadd.xlane.f32.xlu0 %v629
        %v631 = vpop.xlane.xlu0 %630
        %v632 = vrcp.pop %v631
        %v633 = vmul.f32 %v628, %v632
        %v634 = vpack.c.bf16 %v633, %v633
        %635 = vrot.lane.b32.xlu0 %v460, 88
        %v636 = vpop.permute.xlu0 %635
        %v638 = vsel %vm462, %v634, 0
        %v641 = vsel %vm527, %v636, 0
        %643 = vmatprep.subr.bf16.mxu0 0
        %644 = vmatpush1.bf16.msra.mxu0 0
        %645 = vmatprep.subr.bf16.mxu0 0
        %646 = vmatpush1.bf16.msra.mxu0 0
        %647 = vmatprep.subr.bf16.mxu0 0
        %648 = vmatpush1.bf16.msra.mxu0 0
        %649 = vmatprep.subr.bf16.mxu0 0
        %650 = vmatpush1.bf16.msra.mxu0 0
        %651 = vmatprep.subr.bf16.mxu0 0
        %652 = vmatpush1.bf16.msra.mxu0 0
        %653 = vmatprep.subr.bf16.mxu0 0
        %654 = vmatpush1.bf16.msra.mxu0 0
        %655 = vmatprep.subr.bf16.mxu0 0
        %656 = vmatpush1.bf16.msra.mxu0 0
        %657 = vmatprep.subr.bf16.mxu0 0
        %658 = vmatpush1.bf16.msra.mxu0 %v641
        %659 = vmatprep.subr.bf16.mxu0 0
        %660 = vmatpush2.bf16.msra.mxu0 0
        %661 = vmatprep.subr.bf16.mxu0 0
        %662 = vmatpush2.bf16.msra.mxu0 0
        %663 = vmatprep.subr.bf16.mxu0 0
        %664 = vmatpush2.bf16.msra.mxu0 0
        %665 = vmatprep.subr.bf16.mxu0 0
        %666 = vmatpush2.bf16.msra.mxu0 0
        %667 = vmatprep.subr.bf16.mxu0 0
        %668 = vmatpush2.bf16.msra.mxu0 0
        %669 = vmatprep.subr.bf16.mxu0 0
        %670 = vmatpush2.bf16.msra.mxu0 0
        %671 = vmatprep.subr.bf16.mxu0 0
        %672 = vmatpush2.bf16.msra.mxu0 0
        %673 = vmatprep.subr.bf16.mxu0 0
        %674 = vmatpush2.bf16.msra.mxu0 0
        %675 = vmatprep.mubr.bf16.mxu0 0
        %676 = vmatmul.mubr.bf16.gmra.mxu0 %v638
        %v677 = vpop.f32.mrf.mxu0
        %v678 = vadd.f32 0.0, %v677
        %v679 = vpop.f32.mrf.mxu0
        %v680 = vpop.f32.mrf.mxu0
        %v681 = vpop.f32.mrf.mxu0
        %682 = vdwg.mxu0
        %684 = vrot.lane.b32.xlu0 %v678, 8
        %v685 = vpop.permute.xlu0 %684
        %vm687 = vcmask 130112
        %688 = vst.msk [vmem:[#allocation2] sm:$0xff] %vm687, %v685
        %689 = vrot.lane.b32.xlu0 %v459, 112
        %v690 = vpop.permute.xlu0 %689
        %691 = vrot.lane.b32.xlu0 %v460, 112
        %v692 = vpop.permute.xlu0 %691
        %v694 = vsel %vm462, %v690, 0
        %v697 = vsel %vm462, %v692, 0
        %699 = vmatprep.subr.bf16.mxu0 0
        %700 = vmatpush1.bf16.xpose.msra.mxu0 0
        %701 = vmatprep.subr.bf16.mxu0 0
        %702 = vmatpush1.bf16.xpose.msra.mxu0 0
        %703 = vmatprep.subr.bf16.mxu0 0
        %704 = vmatpush1.bf16.xpose.msra.mxu0 0
        %705 = vmatprep.subr.bf16.mxu0 0
        %706 = vmatpush1.bf16.xpose.msra.mxu0 0
        %707 = vmatprep.subr.bf16.mxu0 0
        %708 = vmatpush1.bf16.xpose.msra.mxu0 0
        %709 = vmatprep.subr.bf16.mxu0 0
        %710 = vmatpush1.bf16.xpose.msra.mxu0 0
        %711 = vmatprep.subr.bf16.mxu0 0
        %712 = vmatpush1.bf16.xpose.msra.mxu0 0
        %713 = vmatprep.subr.bf16.mxu0 0
        %714 = vmatpush1.bf16.xpose.msra.mxu0 %v697
        %715 = vmatprep.subr.bf16.mxu0 0
        %716 = vmatpush2.bf16.xpose.msra.mxu0 0
        %717 = vmatprep.subr.bf16.mxu0 0
        %718 = vmatpush2.bf16.xpose.msra.mxu0 0
        %719 = vmatprep.subr.bf16.mxu0 0
        %720 = vmatpush2.bf16.xpose.msra.mxu0 0
        %721 = vmatprep.subr.bf16.mxu0 0
        %722 = vmatpush2.bf16.xpose.msra.mxu0 0
        %723 = vmatprep.subr.bf16.mxu0 0
        %724 = vmatpush2.bf16.xpose.msra.mxu0 0
        %725 = vmatprep.subr.bf16.mxu0 0
        %726 = vmatpush2.bf16.xpose.msra.mxu0 0
        %727 = vmatprep.subr.bf16.mxu0 0
        %728 = vmatpush2.bf16.xpose.msra.mxu0 0
        %729 = vmatprep.subr.bf16.mxu0 0
        %730 = vmatpush2.bf16.xpose.msra.mxu0 0
        %731 = vmatprep.mubr.bf16.mxu0 0
        %732 = vmatmul.mubr.bf16.gmra.mxu0 %v694
        %v733 = vpop.f32.mrf.mxu0
        %v734 = vadd.f32 %v461, %v733
        %v735 = vpop.f32.mrf.mxu0
        %v736 = vpop.f32.mrf.mxu0
        %v737 = vpop.f32.mrf.mxu0
        %738 = vdwg.mxu0
        %v739 = vsel %vm462, %v734, -inf
        %740 = vmax.xlane.f32.xlu0 %v739
        %v741 = vpop.xlane.xlu0 %740
        %v742 = vsub.f32 %v734, %v741
        %v743 = vmul.f32 %v742, 1.442695
        %v744 = vpow.pop %v743
        %v745 = vsel %vm462, %v744, 0.0
        %746 = vadd.xlane.f32.xlu0 %v745
        %v747 = vpop.xlane.xlu0 %746
        %v748 = vrcp.pop %v747
        %v749 = vmul.f32 %v744, %v748
        %v750 = vpack.c.bf16 %v749, %v749
        %751 = vrot.lane.b32.xlu0 %v460, 80
        %v752 = vpop.permute.xlu0 %751
        %v754 = vsel %vm462, %v750, 0
        %v757 = vsel %vm527, %v752, 0
        %759 = vmatprep.subr.bf16.mxu0 0
        %760 = vmatpush1.bf16.msra.mxu0 0
        %761 = vmatprep.subr.bf16.mxu0 0
        %762 = vmatpush1.bf16.msra.mxu0 0
        %763 = vmatprep.subr.bf16.mxu0 0
        %764 = vmatpush1.bf16.msra.mxu0 0
        %765 = vmatprep.subr.bf16.mxu0 0
        %766 = vmatpush1.bf16.msra.mxu0 0
        %767 = vmatprep.subr.bf16.mxu0 0
        %768 = vmatpush1.bf16.msra.mxu0 0
        %769 = vmatprep.subr.bf16.mxu0 0
        %770 = vmatpush1.bf16.msra.mxu0 0
        %771 = vmatprep.subr.bf16.mxu0 0
        %772 = vmatpush1.bf16.msra.mxu0 0
        %773 = vmatprep.subr.bf16.mxu0 0
        %774 = vmatpush1.bf16.msra.mxu0 %v757
        %775 = vmatprep.subr.bf16.mxu0 0
        %776 = vmatpush2.bf16.msra.mxu0 0
        %777 = vmatprep.subr.bf16.mxu0 0
        %778 = vmatpush2.bf16.msra.mxu0 0
        %779 = vmatprep.subr.bf16.mxu0 0
        %780 = vmatpush2.bf16.msra.mxu0 0
        %781 = vmatprep.subr.bf16.mxu0 0
        %782 = vmatpush2.bf16.msra.mxu0 0
        %783 = vmatprep.subr.bf16.mxu0 0
        %784 = vmatpush2.bf16.msra.mxu0 0
        %785 = vmatprep.subr.bf16.mxu0 0
        %786 = vmatpush2.bf16.msra.mxu0 0
        %787 = vmatprep.subr.bf16.mxu0 0
        %788 = vmatpush2.bf16.msra.mxu0 0
        %789 = vmatprep.subr.bf16.mxu0 0
        %790 = vmatpush2.bf16.msra.mxu0 0
        %791 = vmatprep.mubr.bf16.mxu0 0
        %792 = vmatmul.mubr.bf16.gmra.mxu0 %v754
        %v793 = vpop.f32.mrf.mxu0
        %v794 = vadd.f32 0.0, %v793
        %v795 = vpop.f32.mrf.mxu0
        %v796 = vpop.f32.mrf.mxu0
        %v797 = vpop.f32.mrf.mxu0
        %798 = vdwg.mxu0
        %800 = vrot.lane.b32.xlu0 %v794, 16
        %v801 = vpop.permute.xlu0 %800
        %vm803 = vcmask 195712
        %804 = vst.msk [vmem:[#allocation2] sm:$0xff] %vm803, %v801
        %805 = vrot.lane.b32.xlu0 %v459, 104
        %v806 = vpop.permute.xlu0 %805
        %807 = vrot.lane.b32.xlu0 %v460, 104
        %v808 = vpop.permute.xlu0 %807
        %v810 = vsel %vm462, %v806, 0
        %v813 = vsel %vm462, %v808, 0
        %815 = vmatprep.subr.bf16.mxu0 0
        %816 = vmatpush1.bf16.xpose.msra.mxu0 0
        %817 = vmatprep.subr.bf16.mxu0 0
        %818 = vmatpush1.bf16.xpose.msra.mxu0 0
        %819 = vmatprep.subr.bf16.mxu0 0
        %820 = vmatpush1.bf16.xpose.msra.mxu0 0
        %821 = vmatprep.subr.bf16.mxu0 0
        %822 = vmatpush1.bf16.xpose.msra.mxu0 0
        %823 = vmatprep.subr.bf16.mxu0 0
        %824 = vmatpush1.bf16.xpose.msra.mxu0 0
        %825 = vmatprep.subr.bf16.mxu0 0
        %826 = vmatpush1.bf16.xpose.msra.mxu0 0
        %827 = vmatprep.subr.bf16.mxu0 0
        %828 = vmatpush1.bf16.xpose.msra.mxu0 0
        %829 = vmatprep.subr.bf16.mxu0 0
        %830 = vmatpush1.bf16.xpose.msra.mxu0 %v813
        %831 = vmatprep.subr.bf16.mxu0 0
        %832 = vmatpush2.bf16.xpose.msra.mxu0 0
        %833 = vmatprep.subr.bf16.mxu0 0
        %834 = vmatpush2.bf16.xpose.msra.mxu0 0
        %835 = vmatprep.subr.bf16.mxu0 0
        %836 = vmatpush2.bf16.xpose.msra.mxu0 0
        %837 = vmatprep.subr.bf16.mxu0 0
        %838 = vmatpush2.bf16.xpose.msra.mxu0 0
        %839 = vmatprep.subr.bf16.mxu0 0
        %840 = vmatpush2.bf16.xpose.msra.mxu0 0
        %841 = vmatprep.subr.bf16.mxu0 0
        %842 = vmatpush2.bf16.xpose.msra.mxu0 0
        %843 = vmatprep.subr.bf16.mxu0 0
        %844 = vmatpush2.bf16.xpose.msra.mxu0 0
        %845 = vmatprep.subr.bf16.mxu0 0
        %846 = vmatpush2.bf16.xpose.msra.mxu0 0
        %847 = vmatprep.mubr.bf16.mxu0 0
        %848 = vmatmul.mubr.bf16.gmra.mxu0 %v810
        %v849 = vpop.f32.mrf.mxu0
        %v850 = vadd.f32 %v461, %v849
        %v851 = vpop.f32.mrf.mxu0
        %v852 = vpop.f32.mrf.mxu0
        %v853 = vpop.f32.mrf.mxu0
        %854 = vdwg.mxu0
        %v855 = vsel %vm462, %v850, -inf
        %856 = vmax.xlane.f32.xlu0 %v855
        %v857 = vpop.xlane.xlu0 %856
        %v858 = vsub.f32 %v850, %v857
        %v859 = vmul.f32 %v858, 1.442695
        %v860 = vpow.pop %v859
        %v861 = vsel %vm462, %v860, 0.0
        %862 = vadd.xlane.f32.xlu0 %v861
        %v863 = vpop.xlane.xlu0 %862
        %v864 = vrcp.pop %v863
        %v865 = vmul.f32 %v860, %v864
        %v866 = vpack.c.bf16 %v865, %v865
        %867 = vrot.lane.b32.xlu0 %v460, 72
        %v868 = vpop.permute.xlu0 %867
        %v870 = vsel %vm462, %v866, 0
        %v873 = vsel %vm527, %v868, 0
        %875 = vmatprep.subr.bf16.mxu0 0
        %876 = vmatpush1.bf16.msra.mxu0 0
        %877 = vmatprep.subr.bf16.mxu0 0
        %878 = vmatpush1.bf16.msra.mxu0 0
        %879 = vmatprep.subr.bf16.mxu0 0
        %880 = vmatpush1.bf16.msra.mxu0 0
        %881 = vmatprep.subr.bf16.mxu0 0
        %882 = vmatpush1.bf16.msra.mxu0 0
        %883 = vmatprep.subr.bf16.mxu0 0
        %884 = vmatpush1.bf16.msra.mxu0 0
        %885 = vmatprep.subr.bf16.mxu0 0
        %886 = vmatpush1.bf16.msra.mxu0 0
        %887 = vmatprep.subr.bf16.mxu0 0
        %888 = vmatpush1.bf16.msra.mxu0 0
        %889 = vmatprep.subr.bf16.mxu0 0
        %890 = vmatpush1.bf16.msra.mxu0 %v873
        %891 = vmatprep.subr.bf16.mxu0 0
        %892 = vmatpush2.bf16.msra.mxu0 0
        %893 = vmatprep.subr.bf16.mxu0 0
        %894 = vmatpush2.bf16.msra.mxu0 0
        %895 = vmatprep.subr.bf16.mxu0 0
        %896 = vmatpush2.bf16.msra.mxu0 0
        %897 = vmatprep.subr.bf16.mxu0 0
        %898 = vmatpush2.bf16.msra.mxu0 0
        %899 = vmatprep.subr.bf16.mxu0 0
        %900 = vmatpush2.bf16.msra.mxu0 0
        %901 = vmatprep.subr.bf16.mxu0 0
        %902 = vmatpush2.bf16.msra.mxu0 0
        %903 = vmatprep.subr.bf16.mxu0 0
        %904 = vmatpush2.bf16.msra.mxu0 0
        %905 = vmatprep.subr.bf16.mxu0 0
        %906 = vmatpush2.bf16.msra.mxu0 0
        %907 = vmatprep.mubr.bf16.mxu0 0
        %908 = vmatmul.mubr.bf16.gmra.mxu0 %v870
        %v909 = vpop.f32.mrf.mxu0
        %v910 = vadd.f32 0.0, %v909
        %v911 = vpop.f32.mrf.mxu0
        %v912 = vpop.f32.mrf.mxu0
        %v913 = vpop.f32.mrf.mxu0
        %914 = vdwg.mxu0
        %916 = vrot.lane.b32.xlu0 %v910, 24
        %v917 = vpop.permute.xlu0 %916
        %vm919 = vcmask 261312
        %920 = vst.msk [vmem:[#allocation2] sm:$0xff] %vm919, %v917
        %v921 = vld [vmem:[#allocation2] sm:$0xff]
        %v922 = vpack.c.bf16 %v921, %v921
        %v923 = vld [vmem:[#allocation8] sm:$0xf]
        %v924 = vld [vmem:[#allocation8 + $0x4] sm:$0xf]
        %v925 = vld [vmem:[#allocation8 + $0x8] sm:$0xf]
        %v926 = vld [vmem:[#allocation8 + $0xc] sm:$0xf]
        %v927 = vld [vmem:[#allocation9] sm:$0x1]
        %v929 = vlaneseq
        %v930 = vshrl.u32 %v929, 7
        %v931 = vsub.s32 0, %v930
        %v932 = vrot.slane %v927, %v931
        %v938 = vunpack.c.l.b16 %v923
        %v939 = vunpack.c.l.b16 %v924
        %v940 = vunpack.c.l.b16 %v925
        %v941 = vunpack.c.l.b16 %v926
        %v942 = vpack.c.b16 %v939, %v938
        %v943 = vpack.c.b16 %v941, %v940
        %v947 = vsel %vm365, %v922, 0
        %949 = vmatprep.subr.bf16.mxu0 0
        %950 = vmatpush1.bf16.msra.mxu0 0
        %951 = vmatprep.subr.bf16.mxu0 0
        %952 = vmatpush1.bf16.msra.mxu0 0
        %953 = vmatprep.subr.bf16.mxu0 0
        %954 = vmatpush1.bf16.msra.mxu0 0
        %955 = vmatprep.subr.bf16.mxu0 0
        %956 = vmatpush1.bf16.msra.mxu0 0
        %957 = vmatprep.subr.bf16.mxu0 0
        %958 = vmatpush1.bf16.msra.mxu0 0
        %959 = vmatprep.subr.bf16.mxu0 0
        %960 = vmatpush1.bf16.msra.mxu0 0
        %961 = vmatprep.subr.bf16.mxu0 0
        %962 = vmatpush1.bf16.msra.mxu0 %v943
        %963 = vmatprep.subr.bf16.mxu0 0
        %964 = vmatpush1.bf16.msra.mxu0 %v942
        %965 = vmatprep.subr.bf16.mxu0 0
        %966 = vmatpush2.bf16.msra.mxu0 0
        %967 = vmatprep.subr.bf16.mxu0 0
        %968 = vmatpush2.bf16.msra.mxu0 0
        %969 = vmatprep.subr.bf16.mxu0 0
        %970 = vmatpush2.bf16.msra.mxu0 0
        %971 = vmatprep.subr.bf16.mxu0 0
        %972 = vmatpush2.bf16.msra.mxu0 0
        %973 = vmatprep.subr.bf16.mxu0 0
        %974 = vmatpush2.bf16.msra.mxu0 0
        %975 = vmatprep.subr.bf16.mxu0 0
        %976 = vmatpush2.bf16.msra.mxu0 0
        %977 = vmatprep.subr.bf16.mxu0 0
        %978 = vmatpush2.bf16.msra.mxu0 0
        %979 = vmatprep.subr.bf16.mxu0 0
        %980 = vmatpush2.bf16.msra.mxu0 0
        %981 = vmatprep.mubr.bf16.mxu0 0
        %982 = vmatmul.mubr.bf16.gmra.mxu0 %v947
        %v983 = vpop.f32.mrf.mxu0
        %v984 = vadd.f32 %v932, %v983
        %v985 = vpop.f32.mrf.mxu0
        %v986 = vpop.f32.mrf.mxu0
        %v987 = vpop.f32.mrf.mxu0
        %988 = vdwg.mxu0
        %989 = vst.msk [vmem:[%s335] sm:$0xff] %vm365, %v984
        %s990 = sand.u32 %s183, 1
        %s991 = scalar_lea.sflag [#allocation5], %s990
        %s992 = sand.u32 %s183, 1
        %s993 = smul.addr %s992, 8
        %s994 = scalar_lea.vmem [#allocation11], %s993
        // Predicated region
        $region61: #{tpu_custom_call.1} parent=43 // pred_check
          %p995 = pneg %p193
        $region62: #{tpu_custom_call.1} parent=43 // pred_check_branch
          %997 = sbr.rel (%p995) target = $region64
        $region63: #{tpu_custom_call.1} parent=43 // pred_region
          %s999 = ssub.s32 128, 128
          %1000 = vsyncadd %s991, %s999
          %s1001 = sadd.s32 %s30, %s29
          %s1002 = smul.addr %s1001, 128
          %s1003 = scalar_lea.hbm %s6, %s1002
          %s1005 = sshll.u32 %s994, 4
          %s1006 = int_to_ptr.vmem [resolvable:$true] %s1005
          %1008 = dma.vmem_to_hbm [thread:$0]  %s1006, 128, %s1003, %s991
        $region64: #{tpu_custom_call.1} parent=43 // pred_fallthru
          _
      $region44: #{tpu_custom_call.1} parent=5 // pred_fallthru
        _
      %p1009 = scmp.le.s32.totalorder 2, %s20
      // Predicated region
      $region65: #{tpu_custom_call.1} parent=5 // pred_check
        %p1010 = pneg %p1009
      $region66: #{tpu_custom_call.1} parent=5 // pred_check_branch
        %1012 = sbr.rel (%p1010) target = $region68
      $region67: #{tpu_custom_call.1} parent=5 // pred_region
        %s1013 = ssub.s32 %s20, 2
        // Predicated region
        $region69: #{tpu_custom_call.1} parent=67 // pred_check
          %p1014 = pneg %p199
        $region70: #{tpu_custom_call.1} parent=67 // pred_check_branch
          %1016 = sbr.rel (%p1014) target = $region72
        $region71: #{tpu_custom_call.1} parent=67 // pred_region
          %s1017 = sand.u32 %s184, 1
          %s1018 = scalar_lea.sflag [#allocation5], %s1017
          %s1019 = sand.u32 %s184, 1
          %s1020 = smul.addr %s1019, 8
          %s1021 = scalar_lea.vmem [#allocation11], %s1020
          %1022 = dma.done %s1018, 128
        $region72: #{tpu_custom_call.1} parent=67 // pred_fallthru
          _
      $region68: #{tpu_custom_call.1} parent=5 // pred_fallthru
        _
    $region6: #{tpu_custom_call.1} parent=1 // loop_footer
      %s24 = sadd.s32 1, %s20
    $region7: #{tpu_custom_call.1} parent=1 // loop_footer_branch
      %19 = sbr.rel target = $region3
    $region8: #{tpu_custom_call.1} parent=1 // loop_exit
      _
    %1023 = vsyncpa [#allocation4], 1
    %s1024 = scalar_lea.sflag [#allocation4], 1
    %1025 = vsyncpa %s1024, 1
    %1026 = vsyncpa [#allocation7], 1
    %1027 = vsyncpa [#allocation10], 1
    %1028 = vsyncpa [#allocation5], 1
    %s1029 = scalar_lea.sflag [#allocation5], 1
    %1030 = vsyncpa %s1029, 1

</llo_original>
